<compile_context>
chip_gen: v7x
topology: tpu7x:2x2x1
jax: 0.10.0
libtpu: 0.0.40
codegen_flags: <defaults>
</compile_context>

<pallas_src>
import math

import jax
import jax.numpy as jnp
from jax import lax
from jax.experimental import pallas as pl
from jax.experimental.pallas import tpu as pltpu

BN_EPS = 1e-5


def _round_up(x, m):
    return (x + m - 1) // m * m


def _vmem_limit_bytes():
    """Generation-aware scoped-VMEM limit (headroom left for double buffering)."""
    try:
        cap = int(pltpu.get_tpu_info().vmem_capacity_bytes)
    except Exception:
        cap = 64 * 1024 * 1024
    return max(32 * 1024 * 1024, min(cap * 3 // 4, 100 * 1024 * 1024))


def _pick_row_tile(H, W, target_rows=1024):
    """Largest divisor of H such that the matmul row count th*W stays moderate."""
    best = 1
    for d in range(1, H + 1):
        if H % d == 0 and d * W <= max(target_rows, W):
            best = d
    return best


# ----------------------------------------------------------------------------
# Kernel 1: ConvTranspose2d(kernel_size=2, stride=2) as one fused matmul per
# row tile.  The output array is the interleaved x1 tensor viewed as
# (N, H, 2, W, 2*Cup) (same bytes as (N, 2H, 2W, Cup)), so the kernel's two
# contiguous phase stores land the result already stride-2 interleaved in HBM.
# ----------------------------------------------------------------------------
def upconv_kernel(x_ref, w_ref, b_ref, o_ref):
    # x_ref:(1,th,W,Cin) f32   w_ref:(Cin,4*Cup) bf16   b_ref:(1,4*Cup) f32
    # o_ref:(1,th,2,W,2*Cup) bf16
    _, th, W, Cin = x_ref.shape
    two_cup = o_ref.shape[-1]
    xm = x_ref[...].reshape(th * W, Cin).astype(jnp.bfloat16)
    r = jnp.dot(xm, w_ref[...], preferred_element_type=jnp.float32) + b_ref[...]
    r = r.astype(o_ref.dtype)
    # phase a=0 / a=1 rows (columns are already interleaved by the weight layout)
    o_ref[:, :, 0:1, :, :] = r[:, :two_cup].reshape(1, th, 1, W, two_cup)
    o_ref[:, :, 1:2, :, :] = r[:, two_cup:].reshape(1, th, 1, W, two_cup)


# ----------------------------------------------------------------------------
# Shared 3x3 "same" conv over a zero-padded slab held in VMEM scratch.
# Slab layout: pad_ref (H+4, Wp, Cin); image rows at [2, H+2), cols [0, W);
# borders zero.  Taps are contiguous slices of the flattened (rows*Wp) axis.
# ----------------------------------------------------------------------------
def _conv3x3_from_pad(pad_ref, w_ref, H, W, Wp, Co):
    # TODO(synk): switch to a bf16 slab + single cast (kw=+-1 taps via
    # pltpu.roll on the XLU) once lower_as_mlir confirms packed sub-sublane
    # slices lower cleanly; until then keep the known-good f32 slab.
    Cin = pad_ref.shape[-1]
    n_rows = pad_ref.shape[0]                        # H + 4
    flat = pad_ref[...].reshape(n_rows * Wp, Cin)    # Wp % 8 == 0 -> free merge
    L = H * Wp
    acc = None
    for t in range(9):                               # t = 3*kh + kw
        off = (t // 3 + 1) * Wp + (t % 3) - 1
        tap = flat[off:off + L, :].astype(jnp.bfloat16)
        d = jnp.dot(tap, w_ref[t], preferred_element_type=jnp.float32)
        acc = d if acc is None else acc + d
    # valid output columns are the first W of every Wp-wide row
    return acc.reshape(H, Wp, Co)[:, :W, :]


def _zero_slab_borders(pad_ref, H, W, Wp, C):
    """Zero only the halo borders (cheap; safe under parallel grid splitting)."""
    pad_ref[0:2, :, :] = jnp.zeros((2, Wp, C), pad_ref.dtype)
    pad_ref[2 + H:4 + H, :, :] = jnp.zeros((2, Wp, C), pad_ref.dtype)
    if Wp > W:
        pad_ref[2:2 + H, W:Wp, :] = jnp.zeros((H, Wp - W, C), pad_ref.dtype)


# ----------------------------------------------------------------------------
# Kernel 2: [channel-concat (two slab stores) -> Conv3x3(pad=1, no bias)] for
# one image, plus BatchNorm partial sums.  The F.pad of x1 is folded into the
# slab store offsets.
# ----------------------------------------------------------------------------
def conv_cat_stats_kernel(skip_ref, x1_ref, w_ref, o_ref, s_ref, q_ref, pad_ref):
    _, Hs, Ws, Csk = skip_ref.shape
    _, H2, W2, Cup = x1_ref.shape
    Wp = pad_ref.shape[1]
    Ccat = pad_ref.shape[-1]
    Co = o_ref.shape[-1]
    top = (Hs - H2) // 2
    left = (Ws - W2) // 2

    _zero_slab_borders(pad_ref, Hs, Ws, Wp, Ccat)
    if top != 0 or left != 0 or H2 != Hs or W2 != Ws:
        # F.pad zeros of the x1 channels inside the image area (static no-op
        # when the upsampled size already matches the skip).
        pad_ref[2:2 + Hs, 0:Ws, Csk:] = jnp.zeros((Hs, Ws, Ccat - Csk),
                                                  pad_ref.dtype)

    # channel concat = two direct slab stores (no jnp.concatenate temporary)
    pad_ref[2:2 + Hs, 0:Ws, 0:Csk] = skip_ref[0]
    pad_ref[2 + top:2 + top + H2, left:left + W2, Csk:] = \
        x1_ref[0].astype(pad_ref.dtype)

    y = _conv3x3_from_pad(pad_ref, w_ref, Hs, Ws, Wp, Co)
    o_ref[...] = y.reshape(1, Hs, Ws, Co)
    s_ref[...] = jnp.sum(y, axis=(0, 1), keepdims=True)
    q_ref[...] = jnp.sum(y * y, axis=(0, 1), keepdims=True)


# ----------------------------------------------------------------------------
# Kernel 3: fused [BN(prev layer) + ReLU -> Conv3x3(pad=1, no bias)] for one
# image, plus BatchNorm partial sums for the next BN.
# ----------------------------------------------------------------------------
def bn_relu_conv_stats_kernel(x_ref, scale_ref, shift_ref, w_ref,
                              o_ref, s_ref, q_ref, pad_ref):
    _, H, W, C = x_ref.shape
    Wp = pad_ref.shape[1]
    Co = o_ref.shape[-1]

    _zero_slab_borders(pad_ref, H, W, Wp, C)
    xin = jnp.maximum(x_ref[0] * scale_ref[...] + shift_ref[...], 0.0)
    pad_ref[2:2 + H, 0:W, :] = xin

    y = _conv3x3_from_pad(pad_ref, w_ref, H, W, Wp, Co)
    o_ref[...] = y.reshape(1, H, W, Co)
    s_ref[...] = jnp.sum(y, axis=(0, 1), keepdims=True)
    q_ref[...] = jnp.sum(y * y, axis=(0, 1), keepdims=True)


# ----------------------------------------------------------------------------
# Kernel 4: final BatchNorm apply + ReLU (elementwise, lane-dense row tiles).
# ----------------------------------------------------------------------------
def bn_relu_kernel(x_ref, scale_ref, shift_ref, o_ref):
    o_ref[...] = jnp.maximum(x_ref[...] * scale_ref[...] + shift_ref[...], 0.0)


# ----------------------------------------------------------------------------
# Wrapper helpers
# ----------------------------------------------------------------------------
def _bn_affine(s, q, count, gamma, beta):
    """Training-mode BN (batch mean, biased var) -> per-channel scale/shift.
    Note: E[x^2]-E[x]^2 in f32; fine for unit-scale activations."""
    mean = s / count
    var = jnp.maximum(q / count - mean * mean, 0.0)
    scale = gamma.astype(jnp.float32) * lax.rsqrt(var + BN_EPS)
    shift = beta.astype(jnp.float32) - mean * scale
    return scale, shift


def up_forward(x_nchw, skip_nchw, params):
    """Forward pass of `Up`. Inputs/outputs are NCHW (PyTorch convention)."""
    x = jnp.transpose(x_nchw, (0, 2, 3, 1)).astype(jnp.float32)        # NHWC
    skip = jnp.transpose(skip_nchw, (0, 2, 3, 1)).astype(jnp.float32)
    N, H, W, Cin = x.shape
    Cup = params["w_up"].shape[1]                   # = in_channels // 2
    Co = params["w1"].shape[0]
    Hs, Ws, Csk = skip.shape[1], skip.shape[2], skip.shape[3]
    Ccat = Csk + Cup

    vmem_limit = _vmem_limit_bytes()
    cp1 = pltpu.CompilerParams(dimension_semantics=("parallel",),
                               vmem_limit_bytes=vmem_limit)
    cp2 = pltpu.CompilerParams(dimension_semantics=("parallel", "parallel"),
                               vmem_limit_bytes=vmem_limit)

    # ---- 1) ConvTranspose2d(k=2, s=2): fused matmul, output written directly
    # in the interleaved (N, 2H, 2W, Cup) layout (no XLA transpose / pad pass).
    # Weight columns ordered (a, b, co): col = a*2Cup + b*Cup + co.
    w_up = jnp.transpose(params["w_up"], (0, 2, 3, 1)).reshape(Cin, 4 * Cup)
    w_up = w_up.astype(jnp.bfloat16)
    b_up = jnp.tile(params["b_up"].astype(jnp.float32), 4).reshape(1, 4 * Cup)
    th = _pick_row_tile(H, W, target_rows=1024)
    u = pl.pallas_call(
        upconv_kernel,
        grid=(N, H // th),
        in_specs=[pl.BlockSpec((1, th, W, Cin), lambda n, t: (n, t, 0, 0)),
                  pl.BlockSpec((Cin, 4 * Cup), lambda n, t: (0, 0)),
                  pl.BlockSpec((1, 4 * Cup), lambda n, t: (0, 0))],
        out_specs=pl.BlockSpec((1, th, 2, W, 2 * Cup),
                               lambda n, t: (n, t, 0, 0, 0)),
        out_shape=jax.ShapeDtypeStruct((N, H, 2, W, 2 * Cup), jnp.bfloat16),
        compiler_params=cp2,
    )(x, w_up, b_up)
    x1 = u.reshape(N, 2 * H, 2 * W, Cup)            # pure view: same byte layout

    # ---- 2+3) [concat + Conv3x3(w1)] with BN1 batch-stat partial sums.
    # F.pad is folded into where x1 lands in the slab (top/left offsets).
    w1 = jnp.transpose(params["w1"], (2, 3, 1, 0)).reshape(9, Ccat, Co)
    w1 = w1.astype(jnp.bfloat16)
    Wp = _round_up(Ws + 2, 8)
    # TODO(synk): tile the Hs axis with 1-row halos for large images so the
    # per-image slab + blocks fit v7x's 64 MiB VMEM and feed both TensorCores.
    z1, s1, q1 = pl.pallas_call(
        conv_cat_stats_kernel,
        grid=(N,),
        in_specs=[pl.BlockSpec((1, Hs, Ws, Csk), lambda n: (n, 0, 0, 0)),
                  pl.BlockSpec((1, 2 * H, 2 * W, Cup), lambda n: (n, 0, 0, 0)),
                  pl.BlockSpec((9, Ccat, Co), lambda n: (0, 0, 0))],
        out_specs=(pl.BlockSpec((1, Hs, Ws, Co), lambda n: (n, 0, 0, 0)),
                   pl.BlockSpec((1, 1, Co), lambda n: (n, 0, 0)),
                   pl.BlockSpec((1, 1, Co), lambda n: (n, 0, 0))),
        out_shape=(jax.ShapeDtypeStruct((N, Hs, Ws, Co), jnp.float32),
                   jax.ShapeDtypeStruct((N, 1, Co), jnp.float32),
                   jax.ShapeDtypeStruct((N, 1, Co), jnp.float32)),
        scratch_shapes=[pltpu.VMEM((Hs + 4, Wp, Ccat), jnp.float32)],
        compiler_params=cp1,
    )(skip, x1, w1)

    cnt = float(N * Hs * Ws)
    scale1, shift1 = _bn_affine(jnp.sum(s1, axis=(0, 1)),
                                jnp.sum(q1, axis=(0, 1)),
                                cnt, params["g1"], params["be1"])

    # ---- 4) fused [BN1 + ReLU] -> Conv3x3(w2) with BN2 partial sums.
    w2 = jnp.transpose(params["w2"], (2, 3, 1, 0)).reshape(9, Co, Co)
    w2 = w2.astype(jnp.bfloat16)
    z2, s2, q2 = pl.pallas_call(
        bn_relu_conv_stats_kernel,
        grid=(N,),
        in_specs=[pl.BlockSpec((1, Hs, Ws, Co), lambda n: (n, 0, 0, 0)),
                  pl.BlockSpec((1, 1, Co), lambda n: (0, 0, 0)),
                  pl.BlockSpec((1, 1, Co), lambda n: (0, 0, 0)),
                  pl.BlockSpec((9, Co, Co), lambda n: (0, 0, 0))],
        out_specs=(pl.BlockSpec((1, Hs, Ws, Co), lambda n: (n, 0, 0, 0)),
                   pl.BlockSpec((1, 1, Co), lambda n: (n, 0, 0)),
                   pl.BlockSpec((1, 1, Co), lambda n: (n, 0, 0))),
        out_shape=(jax.ShapeDtypeStruct((N, Hs, Ws, Co), jnp.float32),
                   jax.ShapeDtypeStruct((N, 1, Co), jnp.float32),
                   jax.ShapeDtypeStruct((N, 1, Co), jnp.float32)),
        scratch_shapes=[pltpu.VMEM((Hs + 4, Wp, Co), jnp.float32)],
        compiler_params=cp1,
    )(z1, scale1.reshape(1, 1, Co), shift1.reshape(1, 1, Co), w2)

    scale2, shift2 = _bn_affine(jnp.sum(s2, axis=(0, 1)),
                                jnp.sum(q2, axis=(0, 1)),
                                cnt, params["g2"], params["be2"])

    # ---- 5) final BN2 + ReLU (lane-dense: group k pixels per row so the
    # output's last dim is a multiple of 128 -> unmasked full-lane stores).
    M2 = N * Hs * Ws
    k = 128 // math.gcd(Co, 128)
    if M2 % k != 0:
        k = 1
    rows = M2 // k
    tm2 = min(2048, rows)
    y = pl.pallas_call(
        bn_relu_kernel,
        grid=(pl.cdiv(rows, tm2),),
        in_specs=[pl.BlockSpec((tm2, k * Co), lambda i: (i, 0)),
                  pl.BlockSpec((1, k * Co), lambda i: (0, 0)),
                  pl.BlockSpec((1, k * Co), lambda i: (0, 0))],
        out_specs=pl.BlockSpec((tm2, k * Co), lambda i: (i, 0)),
        out_shape=jax.ShapeDtypeStruct((rows, k * Co), jnp.float32),
        compiler_params=cp1,
    )(z2.reshape(rows, k * Co),
      jnp.tile(scale2, k).reshape(1, k * Co),
      jnp.tile(shift2, k).reshape(1, k * Co))

    y = y.reshape(N, Hs, Ws, Co)
    return jnp.transpose(y, (0, 3, 1, 2))                              # NCHW


def init_params(key, in_channels, out_channels):
    ks = jax.random.split(key, 8)
    mid = in_channels // 2
    scale = 0.1
    return {
        # ConvTranspose2d(in, in//2, 2, 2): weight (Cin, Co, 2, 2), bias (Co,)
        "w_up": scale * jax.random.normal(ks[0], (in_channels, mid, 2, 2), jnp.float32),
        "b_up": scale * jax.random.normal(ks[1], (mid,), jnp.float32),
        # Conv2d(in, out, 3, pad=1, bias=False): (Co, Cin, 3, 3)
        "w1": scale * jax.random.normal(ks[2], (out_channels, in_channels, 3, 3), jnp.float32),
        "g1": 1.0 + scale * jax.random.normal(ks[3], (out_channels,), jnp.float32),
        "be1": scale * jax.random.normal(ks[4], (out_channels,), jnp.float32),
        # Conv2d(out, out, 3, pad=1, bias=False)
        "w2": scale * jax.random.normal(ks[5], (out_channels, out_channels, 3, 3), jnp.float32),
        "g2": 1.0 + scale * jax.random.normal(ks[6], (out_channels,), jnp.float32),
        "be2": scale * jax.random.normal(ks[7], (out_channels,), jnp.float32),
    }


if __name__ == "__main__":
    key = jax.random.PRNGKey(0)
    k_in, k_skip, k_par = jax.random.split(key, 3)

    in_channels, out_channels = 8, 4
    N, H, W = 2, 8, 8                 # low-res input; skip is 2x spatial, in//2 channels
    x = jax.random.normal(k_in, (N, in_channels, H, W), jnp.float32)          # NCHW
    skip = jax.random.normal(k_skip, (N, in_channels // 2, 2 * H, 2 * W), jnp.float32)

    params = init_params(k_par, in_channels, out_channels)

    out = jax.block_until_ready(up_forward(x, skip, params))
    assert out.shape == (N, out_channels, 2 * H, 2 * W)
    assert bool(jnp.all(jnp.isfinite(out)))
    print("KERNEL_OK")
</pallas_src>

<mosaic_0001>
module attributes {stable_mosaic.version = 11 : i64} {
  func.func @upconv_kernel(%arg0: i32, %arg1: i32, %arg2: memref<1x8x8x8xf32, #tpu.memory_space<vmem>>, %arg3: memref<8x16xbf16, #tpu.memory_space<vmem>>, %arg4: memref<1x16xf32, #tpu.memory_space<vmem>>, %arg5: memref<1x8x2x8x8xbf16, #tpu.memory_space<vmem>>) attributes {dimension_semantics = [#tpu.dimension_semantics<parallel>, #tpu.dimension_semantics<parallel>], iteration_bounds = array<i64: 2, 1>, scalar_prefetch = 0 : i64, scratch_operands = 0 : i64, tpu.core_type = #tpu.core_type<tc>, window_params = [{transform_indices = @transform_0, window_bounds = array<i64: 1, 8, 8, 8>}, {pipeline_mode = #tpu.pipeline_mode<synchronous>, transform_indices = @transform_1, window_bounds = array<i64: 8, 16>}, {pipeline_mode = #tpu.pipeline_mode<synchronous>, transform_indices = @transform_2, window_bounds = array<i64: 1, 16>}, {transform_indices = @transform_3, window_bounds = array<i64: 1, 8, 2, 8, 8>}]} {
    %c0 = arith.constant 0 : index
    %c0_0 = arith.constant 0 : index
    %c0_1 = arith.constant 0 : index
    %c0_2 = arith.constant 0 : index
    %0 = vector.load %arg2[%c0, %c0_0, %c0_1, %c0_2] : memref<1x8x8x8xf32, #tpu.memory_space<vmem>>, vector<1x8x8x8xf32>
    %1 = vector.shape_cast %0 : vector<1x8x8x8xf32> to vector<64x8xf32>
    %2 = arith.truncf %1 : vector<64x8xf32> to vector<64x8xbf16>
    %c0_3 = arith.constant 0 : index
    %c0_4 = arith.constant 0 : index
    %3 = vector.load %arg3[%c0_3, %c0_4] : memref<8x16xbf16, #tpu.memory_space<vmem>>, vector<8x16xbf16>
    %cst = arith.constant dense<0.000000e+00> : vector<64x16xf32>
    %4 = tpu.matmul %2, %3, %cst {dimension_numbers = #tpu.dot_dimension_numbers<[1], [0], [0], [1], [0, 0, 1, 1], [], []>} : vector<64x8xbf16>, vector<8x16xbf16>, vector<64x16xf32> -> vector<64x16xf32>
    %c0_5 = arith.constant 0 : index
    %c0_6 = arith.constant 0 : index
    %5 = vector.load %arg4[%c0_5, %c0_6] : memref<1x16xf32, #tpu.memory_space<vmem>>, vector<1x16xf32>
    %6 = vector.broadcast %5 : vector<1x16xf32> to vector<64x16xf32>
    %7 = arith.addf %4, %6 : vector<64x16xf32>
    %8 = arith.truncf %7 : vector<64x16xf32> to vector<64x16xbf16>
    %9 = vector.extract_strided_slice %8 {offsets = [0, 0], sizes = [64, 8], strides = [1, 1]} : vector<64x16xbf16> to vector<64x8xbf16>
    %10 = vector.shape_cast %9 : vector<64x8xbf16> to vector<1x8x1x8x8xbf16>
    %c0_7 = arith.constant 0 : index
    %c0_8 = arith.constant 0 : index
    %c0_9 = arith.constant 0 : index
    %c0_10 = arith.constant 0 : index
    %c0_11 = arith.constant 0 : index
    %11 = vector.load %arg5[%c0_7, %c0_8, %c0_9, %c0_10, %c0_11] : memref<1x8x2x8x8xbf16, #tpu.memory_space<vmem>>, vector<1x8x1x8x8xbf16>
    tpu.vector_store %arg5[%c0_7, %c0_8, %c0_9, %c0_10, %c0_11], %10 {strides = array<i32>} : memref<1x8x2x8x8xbf16, #tpu.memory_space<vmem>>, vector<1x8x1x8x8xbf16>,
    %12 = vector.extract_strided_slice %8 {offsets = [0, 8], sizes = [64, 8], strides = [1, 1]} : vector<64x16xbf16> to vector<64x8xbf16>
    %13 = vector.shape_cast %12 : vector<64x8xbf16> to vector<1x8x1x8x8xbf16>
    %c0_12 = arith.constant 0 : index
    %c0_13 = arith.constant 0 : index
    %c1 = arith.constant 1 : index
    %c0_14 = arith.constant 0 : index
    %c0_15 = arith.constant 0 : index
    %14 = vector.load %arg5[%c0_12, %c0_13, %c1, %c0_14, %c0_15] : memref<1x8x2x8x8xbf16, #tpu.memory_space<vmem>>, vector<1x8x1x8x8xbf16>
    tpu.vector_store %arg5[%c0_12, %c0_13, %c1, %c0_14, %c0_15], %13 {strides = array<i32>} : memref<1x8x2x8x8xbf16, #tpu.memory_space<vmem>>, vector<1x8x1x8x8xbf16>,
    return
  }
  func.func @transform_0(%arg0: i32, %arg1: i32) -> (i32, i32, i32, i32) {
    %c0_i32 = arith.constant 0 : i32
    %c0_i32_0 = arith.constant 0 : i32
    %c0_i32_1 = arith.constant 0 : i32
    return %arg0, %arg1, %c0_i32, %c0_i32_0 : i32, i32, i32, i32
  }
  func.func @transform_1(%arg0: i32, %arg1: i32) -> (i32, i32) {
    %c0_i32 = arith.constant 0 : i32
    %c0_i32_0 = arith.constant 0 : i32
    %c0_i32_1 = arith.constant 0 : i32
    return %c0_i32, %c0_i32_0 : i32, i32
  }
  func.func @transform_2(%arg0: i32, %arg1: i32) -> (i32, i32) {
    %c0_i32 = arith.constant 0 : i32
    %c0_i32_0 = arith.constant 0 : i32
    %c0_i32_1 = arith.constant 0 : i32
    return %c0_i32, %c0_i32_0 : i32, i32
  }
  func.func @transform_3(%arg0: i32, %arg1: i32) -> (i32, i32, i32, i32, i32) {
    %c0_i32 = arith.constant 0 : i32
    %c0_i32_0 = arith.constant 0 : i32
    %c0_i32_1 = arith.constant 0 : i32
    %c0_i32_2 = arith.constant 0 : i32
    return %arg0, %arg1, %c0_i32, %c0_i32_0, %c0_i32_1 : i32, i32, i32, i32, i32
  }
}

</mosaic_0001>

<llo_original>
// kernel: tpu_custom_call.1
$region0: #{tpu_custom_call.1}
  #allocation0 [shape = 'u32[]', space=smem, size = 0x4, offset = 0x4, fixed_abs, tag = 'smem constant byte address 0x4 - core index']
  #allocation1 [shape = 'u32[144,128]{1,0:T(1,128)}', space=vmem, size = 0x12000, scoped, tag = 'internal scratch']
  %s0 = inlined_call_operand.hbm [shape: f32[2,8,8,8], index: 0, kind: input, shape index: {}]
  %s1 = inlined_call_operand.hbm [shape: bf16[8,16], index: 1, kind: input, shape index: {}]
  %s2 = inlined_call_operand.vmem [shape: f32[1,16], index: 2, kind: input, shape index: {}]
  %s3 = inlined_call_operand.hbm [shape: bf16[2,8,2,8,8], index: 3, kind: output, shape index: {}]
  %s4 = sld [smem:[#allocation0]]
  $region53: #{tpu_custom_call.1} parent=0
    _
  %s6 = ssub.s32 1, %s4
  %s7 = scalar_select 0, %s6, %s4
  $region1: #{tpu_custom_call.1} parent=0
    #allocation2 [shape = 'u8[65536]{0}', space=vmem, size = 0x10000, scoped, tag = 'input window, operand 0']
    #allocation3 [shape = 's32[2]{0}', space=sflag, size = 0x8, scoped, tag = 'scoped memory for tpu_custom_call.1']
    #allocation4 [shape = 's32[2]{0}', space=sflag, size = 0x8, scoped, tag = 'scoped memory for tpu_custom_call.1']
    #allocation5 [shape = 'u8[2048]{0}', space=vmem, size = 0x800, scoped, tag = 'input window, operand 1, single buffered']
    #allocation6 [shape = 's32[1]{0}', space=sflag, size = 0x4, scoped, tag = 'scoped memory for tpu_custom_call.1']
    #allocation7 [shape = 'u8[65536]{0}', space=vmem, size = 0x10000, scoped, tag = 'output window, operand 0']
    %8 = vsyncpa [#allocation3], 0
    %s9 = scalar_lea.sflag [#allocation3], 1
    %10 = vsyncpa %s9, 0
    %11 = vsyncpa [#allocation6], 0
    %12 = vsyncpa [#allocation4], 0
    %s13 = scalar_lea.sflag [#allocation4], 1
    %14 = vsyncpa %s13, 0
    loop: start=0, step=1, limit=4
    $region2: #{tpu_custom_call.1} parent=1 // loop_pre_header
      _
    $region3: #{tpu_custom_call.1} parent=1 // loop_header
      %s16 = sphi 0, %s20
      %p17 = scmp.ge.s32.totalorder %s16, 4
      %s23 = sphi 0, %s35
      %s24 = sphi 0, %s31
      %s25 = sphi 0, %s23
      %s26 = sphi 0, %s24
      %s27 = sphi 0, %s25
      %s28 = sphi 0, %s26
      %s40 = sphi 0, %s42
      %s43 = sphi 0, %s40
      %s44 = sphi 0, %s43
      %s60 = sphi 0, %s44
      %s64 = sphi 0, %s64
      %s66 = sphi 0, %s64
      %s67 = sphi 0, %s66
      %s81 = sphi 0, %s67
      %s85 = sphi 0, %s85
      %s87 = sphi 0, %s85
      %s88 = sphi 0, %s87
      %s102 = sphi 0, %s88
      %s110 = sphi 0, %s112
      %s113 = sphi 0, %s110
      %s114 = sphi 0, %s113
      %s130 = sphi 0, %s114
    $region4: #{tpu_custom_call.1} parent=1 // loop_header_branch
      %19 = sbr.rel (%p17) target = $region8
    $region5: #{tpu_custom_call.1} parent=1 // loop_body
      %s21 = ssub.s32 %s16, 1
      %s22 = ssub.s32 %s16, 2
      %s29 = sadd.s32 1, %s24
      %p30 = scmp.ge.s32.totalorder %s29, 1
      %s31 = scalar_select %p30, 0, %s29
      %s32 = sadd.s32 1, %s23
      %s33 = scalar_select %p30, %s32, %s23
      %p34 = scmp.ge.s32.totalorder %s33, 2
      %s35 = scalar_select %p34, 0, %s33
      %s36 = ssub.s32 %s23, %s35
      %s37 = ssub.s32 %s24, %s31
      %s38 = sor.u32 %s36, %s37
      %p39 = scmp.eq.s32.totalorder %s38, 0
      %s41 = sadd.s32 %s40, 1
      %s42 = scalar_select %p39, %s40, %s41
      %p45 = pneg %p39
      %p46 = scmp.eq.s32.totalorder %s16, 1
      %p47 = por %p45, %p46
      %p48 = scmp.ne.s32.totalorder %s40, %s43
      %p49 = scmp.eq.s32.totalorder %s16, 0
      %p50 = por %p48, %p49
      %p51 = scmp.ne.s32.totalorder %s40, %s43
      %p52 = scmp.eq.s32.totalorder %s21, 1
      %p53 = por %p51, %p52
      %p54 = scmp.ne.s32.totalorder %s43, %s44
      %p55 = scmp.eq.s32.totalorder %s21, 0
      %p56 = por %p54, %p55
      %p57 = scmp.ne.s32.totalorder %s43, %s44
      %p58 = scmp.eq.s32.totalorder %s22, 1
      %p59 = por %p57, %p58
      %p61 = scmp.ne.s32.totalorder %s44, %s60
      %p62 = scmp.eq.s32.totalorder %s22, 0
      %p63 = por %p61, %p62
      %s65 = sadd.s32 %s64, 1
      %p68 = scmp.eq.s32.totalorder %s16, 1
      %p69 = scmp.ne.s32.totalorder %s64, %s66
      %p70 = scmp.eq.s32.totalorder %s16, 0
      %p71 = por %p69, %p70
      %p72 = scmp.ne.s32.totalorder %s64, %s66
      %p73 = scmp.eq.s32.totalorder %s21, 1
      %p74 = por %p72, %p73
      %p75 = scmp.ne.s32.totalorder %s66, %s67
      %p76 = scmp.eq.s32.totalorder %s21, 0
      %p77 = por %p75, %p76
      %p78 = scmp.ne.s32.totalorder %s66, %s67
      %p79 = scmp.eq.s32.totalorder %s22, 1
      %p80 = por %p78, %p79
      %p82 = scmp.ne.s32.totalorder %s67, %s81
      %p83 = scmp.eq.s32.totalorder %s22, 0
      %p84 = por %p82, %p83
      %s86 = sadd.s32 %s85, 1
      %p89 = scmp.eq.s32.totalorder %s16, 1
      %p90 = scmp.ne.s32.totalorder %s85, %s87
      %p91 = scmp.eq.s32.totalorder %s16, 0
      %p92 = por %p90, %p91
      %p93 = scmp.ne.s32.totalorder %s85, %s87
      %p94 = scmp.eq.s32.totalorder %s21, 1
      %p95 = por %p93, %p94
      %p96 = scmp.ne.s32.totalorder %s87, %s88
      %p97 = scmp.eq.s32.totalorder %s21, 0
      %p98 = por %p96, %p97
      %p99 = scmp.ne.s32.totalorder %s87, %s88
      %p100 = scmp.eq.s32.totalorder %s22, 1
      %p101 = por %p99, %p100
      %p103 = scmp.ne.s32.totalorder %s88, %s102
      %p104 = scmp.eq.s32.totalorder %s22, 0
      %p105 = por %p103, %p104
      %s106 = ssub.s32 %s23, %s35
      %s107 = ssub.s32 %s24, %s31
      %s108 = sor.u32 %s106, %s107
      %p109 = scmp.eq.s32.totalorder %s108, 0
      %s111 = sadd.s32 %s110, 1
      %s112 = scalar_select %p109, %s110, %s111
      %p115 = pneg %p109
      %p116 = scmp.eq.s32.totalorder %s16, 1
      %p117 = por %p115, %p116
      %p118 = scmp.ne.s32.totalorder %s110, %s113
      %p119 = scmp.eq.s32.totalorder %s16, 0
      %p120 = por %p118, %p119
      %p121 = scmp.ne.s32.totalorder %s110, %s113
      %p122 = scmp.eq.s32.totalorder %s21, 1
      %p123 = por %p121, %p122
      %p124 = scmp.ne.s32.totalorder %s113, %s114
      %p125 = scmp.eq.s32.totalorder %s21, 0
      %p126 = por %p124, %p125
      %p127 = scmp.ne.s32.totalorder %s113, %s114
      %p128 = scmp.eq.s32.totalorder %s22, 1
      %p129 = por %p127, %p128
      %p131 = scmp.ne.s32.totalorder %s114, %s130
      %p132 = scmp.eq.s32.totalorder %s22, 0
      %p133 = por %p131, %p132
      %p134 = scmp.le.s32.totalorder 1, %s16
      %p135 = scmp.lt.s32.totalorder %s16, 3
      %p136 = pnand %p134, %p135
      %p137 = pneg %p136
      // Predicated region
      $region9: #{tpu_custom_call.1} parent=5 // pred_check
        _
      $region10: #{tpu_custom_call.1} parent=5 // pred_check_branch
        %139 = sbr.rel (%p136) target = $region12
      $region11: #{tpu_custom_call.1} parent=5 // pred_region
        %s140 = ssub.s32 %s16, 1
        // Predicated region
        $region13: #{tpu_custom_call.1} parent=11 // pred_check
          %p141 = pneg %p77
        $region14: #{tpu_custom_call.1} parent=11 // pred_check_branch
          %143 = sbr.rel (%p141) target = $region16
        $region15: #{tpu_custom_call.1} parent=11 // pred_region
          %s145 = ssub.s32 64, 64
          %146 = vsyncadd [#allocation6], %s145
          %s148 = sshll.u32 [#allocation5], 4
          %s149 = int_to_ptr.vmem [resolvable:$true] %s148
          %151 = dma.hbm_to_vmem [thread:$0]  %s1, 64, %s149, [#allocation6]
        $region16: #{tpu_custom_call.1} parent=11 // pred_fallthru
          _
        // Predicated region
        $region17: #{tpu_custom_call.1} parent=11 // pred_check
          %p152 = pneg %p98
        $region18: #{tpu_custom_call.1} parent=11 // pred_check_branch
          %154 = sbr.rel (%p152) target = $region20
        $region19: #{tpu_custom_call.1} parent=11 // pred_region
          _
        $region20: #{tpu_custom_call.1} parent=11 // pred_fallthru
          _
      $region12: #{tpu_custom_call.1} parent=5 // pred_fallthru
        _
      %p155 = scmp.lt.s32.totalorder %s16, 2
      // Predicated region
      $region21: #{tpu_custom_call.1} parent=5 // pred_check
        %p156 = pneg %p155
      $region22: #{tpu_custom_call.1} parent=5 // pred_check_branch
        %158 = sbr.rel (%p156) target = $region24
      $region23: #{tpu_custom_call.1} parent=5 // pred_region
        // Predicated region
        $region25: #{tpu_custom_call.1} parent=23 // pred_check
          %p159 = pneg %p50
        $region26: #{tpu_custom_call.1} parent=23 // pred_check_branch
          %161 = sbr.rel (%p159) target = $region28
        $region27: #{tpu_custom_call.1} parent=23 // pred_region
          %s162 = sand.u32 %s40, 1
          %s163 = scalar_lea.sflag [#allocation3], %s162
          %s164 = sand.u32 %s40, 1
          %s165 = smul.addr %s164, 64
          %s166 = scalar_lea.vmem [#allocation2], %s165
          %s167 = smul.u32 8, %s24
          %s169 = ssub.s32 1024, 1024
          %170 = vsyncadd %s163, %s169
          %s171 = smul.addr %s23, 8
          %s172 = sadd.s32 %s167, %s171
          %s173 = smul.addr %s172, 128
          %s174 = scalar_lea.hbm %s0, %s173
          %s175 = sshll.u32 %s166, 4
          %s176 = int_to_ptr.vmem [resolvable:$true] %s175
          %181 = dma.hbm_to_vmem [thread:$0]  %s174, 1024, %s176, %s163, 128, 128, 8
        $region28: #{tpu_custom_call.1} parent=23 // pred_fallthru
          _
      $region24: #{tpu_custom_call.1} parent=5 // pred_fallthru
        _
      %p182 = scmp.le.s32.totalorder 1, %s16
      %p183 = scmp.lt.s32.totalorder %s16, 3
      %p184 = pnand %p182, %p183
      %p185 = pneg %p184
      // Predicated region
      $region29: #{tpu_custom_call.1} parent=5 // pred_check
        _
      $region30: #{tpu_custom_call.1} parent=5 // pred_check_branch
        %187 = sbr.rel (%p184) target = $region32
      $region31: #{tpu_custom_call.1} parent=5 // pred_region
        %s188 = ssub.s32 %s16, 1
        %s189 = sand.u32 %s43, 1
        %s190 = scalar_lea.sflag [#allocation3], %s189
        %s191 = sand.u32 %s43, 1
        %s192 = smul.addr %s191, 64
        %s193 = scalar_lea.vmem [#allocation2], %s192
        // Predicated region
        $region33: #{tpu_custom_call.1} parent=31 // pred_check
          %p194 = pneg %p56
        $region34: #{tpu_custom_call.1} parent=31 // pred_check_branch
          %196 = sbr.rel (%p194) target = $region36
        $region35: #{tpu_custom_call.1} parent=31 // pred_region
          %197 = dma.done %s190, 1024
        $region36: #{tpu_custom_call.1} parent=31 // pred_fallthru
          _
        // Predicated region
        $region37: #{tpu_custom_call.1} parent=31 // pred_check
          %p198 = pneg %p77
        $region38: #{tpu_custom_call.1} parent=31 // pred_check_branch
          %200 = sbr.rel (%p198) target = $region40
        $region39: #{tpu_custom_call.1} parent=31 // pred_region
          %201 = dma.done [#allocation6], 64
        $region40: #{tpu_custom_call.1} parent=31 // pred_fallthru
          _
        %s202 = sand.u32 %s43, 1
        %s203 = scalar_lea.sflag [#allocation3], %s202
        %s204 = sand.u32 %s43, 1
        %s205 = smul.addr %s204, 64
        %s206 = scalar_lea.vmem [#allocation2], %s205
        %p207 = pneg %p56
        %p208 = pneg %p53
        %p209 = pneg %p77
        %p210 = pneg %p74
        %p211 = pneg %p98
        %p212 = pneg %p95
        %p213 = pneg %p126
        %p214 = pneg %p123
        %s215 = sand.u32 %s113, 1
        %s216 = scalar_lea.sflag [#allocation4], %s215
        %s217 = sand.u32 %s113, 1
        %s218 = smul.addr %s217, 64
        %s219 = scalar_lea.vmem [#allocation7], %s218
        %s220 = smul.u32 8, %s26
        %s221 = smul.u32 8, %s26
        %v223 = vld [vmem:[%s193] sm:$0xff]
        %v224 = vld [vmem:[%s193 + $0x8] sm:$0xff]
        %v225 = vld [vmem:[%s193 + $0x10] sm:$0xff]
        %v226 = vld [vmem:[%s193 + $0x18] sm:$0xff]
        %v227 = vld [vmem:[%s193 + $0x20] sm:$0xff]
        %v228 = vld [vmem:[%s193 + $0x28] sm:$0xff]
        %v229 = vld [vmem:[%s193 + $0x30] sm:$0xff]
        %v230 = vld [vmem:[%s193 + $0x38] sm:$0xff]
        %v231 = vpack.c.bf16 %v224, %v223
        %v232 = vpack.c.bf16 %v226, %v225
        %v233 = vpack.c.bf16 %v228, %v227
        %v234 = vpack.c.bf16 %v230, %v229
        %v235 = vld [vmem:[#allocation5] sm:$0xf]
        %v236 = vld [vmem:[%s2] sm:$0x1]
        %v238 = vlaneseq
        %v239 = vshrl.u32 %v238, 7
        %v240 = vsub.s32 0, %v239
        %v241 = vrot.slane %v236, %v240
        %vm243 = vcmask 64512
        %v245 = vsel %vm243, %v231, 0
        %v248 = vsel %vm243, %v232, 0
        %v251 = vsel %vm243, %v233, 0
        %v254 = vsel %vm243, %v234, 0
        %vm256 = vcmask 1043456
        %v258 = vsel %vm256, %v235, 0
        %260 = vmatprep.subr.bf16.mxu0 0
        %261 = vmatpush1.bf16.msra.mxu0 %v258
        %262 = vmatprep.subr.bf16.mxu0 0
        %263 = vmatpush1.bf16.msra.mxu0 0
        %264 = vmatprep.subr.bf16.mxu0 0
        %265 = vmatpush1.bf16.msra.mxu0 0
        %266 = vmatprep.subr.bf16.mxu0 0
        %267 = vmatpush1.bf16.msra.mxu0 0
        %268 = vmatprep.subr.bf16.mxu0 0
        %269 = vmatpush1.bf16.msra.mxu0 0
        %270 = vmatprep.subr.bf16.mxu0 0
        %271 = vmatpush1.bf16.msra.mxu0 0
        %272 = vmatprep.subr.bf16.mxu0 0
        %273 = vmatpush1.bf16.msra.mxu0 0
        %274 = vmatprep.subr.bf16.mxu0 0
        %275 = vmatpush1.bf16.msra.mxu0 0
        %276 = vmatprep.subr.bf16.mxu0 0
        %277 = vmatpush1.bf16.msra.mxu0 0
        %278 = vmatprep.subr.bf16.mxu0 0
        %279 = vmatpush1.bf16.msra.mxu0 0
        %280 = vmatprep.subr.bf16.mxu0 0
        %281 = vmatpush1.bf16.msra.mxu0 0
        %282 = vmatprep.subr.bf16.mxu0 0
        %283 = vmatpush1.bf16.msra.mxu0 0
        %284 = vmatprep.subr.bf16.mxu0 0
        %285 = vmatpush1.bf16.msra.mxu0 0
        %286 = vmatprep.subr.bf16.mxu0 0
        %287 = vmatpush1.bf16.msra.mxu0 0
        %288 = vmatprep.subr.bf16.mxu0 0
        %289 = vmatpush1.bf16.msra.mxu0 0
        %290 = vmatprep.subr.bf16.mxu0 0
        %291 = vmatpush1.bf16.msra.mxu0 0
        %292 = vmatprep.mubr.bf16.mxu0 0
        %293 = vmatmul.mubr.bf16.gmra.mrb[0].mxu0 %v245
        %v294 = vpop.f32.mrb[0].mxu0
        %v295 = vadd.f32 %v241, %v294
        %v296 = vpop.f32.mrb[0].mxu0
        %v297 = vpop.f32.mrb[0].mxu0
        %v298 = vadd.f32 %v241, %v297
        %v299 = vpop.f32.mrb[0].mxu0
        %300 = vmatprep.mubr.bf16.mxu0 0
        %301 = vmatmul.mubr.bf16.gmra.mrb[0].mxu0 %v248
        %v302 = vpop.f32.mrb[0].mxu0
        %v303 = vadd.f32 %v241, %v302
        %v304 = vpop.f32.mrb[0].mxu0
        %v305 = vpop.f32.mrb[0].mxu0
        %v306 = vadd.f32 %v241, %v305
        %v307 = vpop.f32.mrb[0].mxu0
        %308 = vmatprep.mubr.bf16.mxu0 0
        %309 = vmatmul.mubr.bf16.gmra.mrb[0].mxu0 %v251
        %v310 = vpop.f32.mrb[0].mxu0
        %v311 = vadd.f32 %v241, %v310
        %v312 = vpop.f32.mrb[0].mxu0
        %v313 = vpop.f32.mrb[0].mxu0
        %v314 = vadd.f32 %v241, %v313
        %v315 = vpop.f32.mrb[0].mxu0
        %316 = vmatprep.mubr.bf16.mxu0 0
        %317 = vmatmul.mubr.bf16.gmra.mrb[0].mxu0 %v254
        %v318 = vpop.f32.mrb[0].mxu0
        %v319 = vadd.f32 %v241, %v318
        %v320 = vpop.f32.mrb[0].mxu0
        %v321 = vpop.f32.mrb[0].mxu0
        %v322 = vadd.f32 %v241, %v321
        %v323 = vpop.f32.mrb[0].mxu0
        %324 = vdwg.mxu0
        %v325 = vpack.c.bf16 %v298, %v295
        %v326 = vpack.c.bf16 %v306, %v303
        %v327 = vpack.c.bf16 %v314, %v311
        %v328 = vpack.c.bf16 %v322, %v319
        %v333 = vunpack.c.l.b16 %v325
        %v334 = vunpack.c.h.b16 %v325
        %v335 = vunpack.c.l.b16 %v326
        %v336 = vunpack.c.h.b16 %v326
        %v337 = vunpack.c.l.b16 %v327
        %v338 = vunpack.c.h.b16 %v327
        %v339 = vunpack.c.l.b16 %v328
        %v340 = vunpack.c.h.b16 %v328
        %v341 = vpack.c.b16 %v333, %v333
        %v342 = vpack.c.b16 %v334, %v334
        %v343 = vpack.c.b16 %v335, %v335
        %v344 = vpack.c.b16 %v336, %v336
        %v345 = vpack.c.b16 %v337, %v337
        %v346 = vpack.c.b16 %v338, %v338
        %v347 = vpack.c.b16 %v339, %v339
        %v348 = vpack.c.b16 %v340, %v340
        %vm357 = vcmask 60416
        %358 = vst.msk [vmem:[%s219] sm:$0xf] %vm357, %v341
        %359 = vst.msk [vmem:[%s219 + $0x8] sm:$0xf] %vm357, %v342
        %360 = vst.msk [vmem:[%s219 + $0x10] sm:$0xf] %vm357, %v343
        %361 = vst.msk [vmem:[%s219 + $0x18] sm:$0xf] %vm357, %v344
        %362 = vst.msk [vmem:[%s219 + $0x20] sm:$0xf] %vm357, %v345
        %363 = vst.msk [vmem:[%s219 + $0x28] sm:$0xf] %vm357, %v346
        %364 = vst.msk [vmem:[%s219 + $0x30] sm:$0xf] %vm357, %v347
        %365 = vst.msk [vmem:[%s219 + $0x38] sm:$0xf] %vm357, %v348
        %366 = vrot.lane.b32.xlu0 %v341, 120
        %v367 = vpop.permute.xlu0 %366
        %368 = vrot.lane.b32.xlu0 %v342, 120
        %v369 = vpop.permute.xlu0 %368
        %370 = vrot.lane.b32.xlu0 %v343, 120
        %v371 = vpop.permute.xlu0 %370
        %372 = vrot.lane.b32.xlu0 %v344, 120
        %v373 = vpop.permute.xlu0 %372
        %374 = vrot.lane.b32.xlu0 %v345, 120
        %v375 = vpop.permute.xlu0 %374
        %376 = vrot.lane.b32.xlu0 %v346, 120
        %v377 = vpop.permute.xlu0 %376
        %378 = vrot.lane.b32.xlu0 %v347, 120
        %v379 = vpop.permute.xlu0 %378
        %380 = vrot.lane.b32.xlu0 %v348, 120
        %v381 = vpop.permute.xlu0 %380
        %s390 = scalar_lea.vmem %s219, 4 [#allocation7]
        %391 = vst.msk [vmem:[%s390] sm:$0xf] %vm357, %v367
        %392 = vst.msk [vmem:[%s390 + $0x8] sm:$0xf] %vm357, %v369
        %393 = vst.msk [vmem:[%s390 + $0x10] sm:$0xf] %vm357, %v371
        %394 = vst.msk [vmem:[%s390 + $0x18] sm:$0xf] %vm357, %v373
        %395 = vst.msk [vmem:[%s390 + $0x20] sm:$0xf] %vm357, %v375
        %396 = vst.msk [vmem:[%s390 + $0x28] sm:$0xf] %vm357, %v377
        %397 = vst.msk [vmem:[%s390 + $0x30] sm:$0xf] %vm357, %v379
        %398 = vst.msk [vmem:[%s390 + $0x38] sm:$0xf] %vm357, %v381
        %s399 = sand.u32 %s113, 1
        %s400 = scalar_lea.sflag [#allocation4], %s399
        %s401 = sand.u32 %s113, 1
        %s402 = smul.addr %s401, 64
        %s403 = scalar_lea.vmem [#allocation7], %s402
        // Predicated region
        $region41: #{tpu_custom_call.1} parent=31 // pred_check
          %p404 = pneg %p123
        $region42: #{tpu_custom_call.1} parent=31 // pred_check_branch
          %406 = sbr.rel (%p404) target = $region44
        $region43: #{tpu_custom_call.1} parent=31 // pred_region
          %s407 = smul.u32 8, %s26
          %s409 = ssub.s32 1024, 1024
          %410 = vsyncadd %s400, %s409
          %s411 = smul.addr %s407, 2
          %s412 = smul.addr %s25, 16
          %s413 = sadd.s32 %s411, %s412
          %s414 = smul.addr %s413, 64
          %s415 = scalar_lea.hbm %s3, %s414
          %s416 = sshll.u32 %s403, 4
          %s417 = int_to_ptr.vmem [resolvable:$true] %s416
          %422 = dma.vmem_to_hbm [thread:$0]  %s417, 1024, %s415, %s400, 64, 64, 4
        $region44: #{tpu_custom_call.1} parent=31 // pred_fallthru
          _
      $region32: #{tpu_custom_call.1} parent=5 // pred_fallthru
        _
      %p423 = scmp.le.s32.totalorder 2, %s16
      // Predicated region
      $region45: #{tpu_custom_call.1} parent=5 // pred_check
        %p424 = pneg %p423
      $region46: #{tpu_custom_call.1} parent=5 // pred_check_branch
        %426 = sbr.rel (%p424) target = $region48
      $region47: #{tpu_custom_call.1} parent=5 // pred_region
        %s427 = ssub.s32 %s16, 2
        // Predicated region
        $region49: #{tpu_custom_call.1} parent=47 // pred_check
          %p428 = pneg %p129
        $region50: #{tpu_custom_call.1} parent=47 // pred_check_branch
          %430 = sbr.rel (%p428) target = $region52
        $region51: #{tpu_custom_call.1} parent=47 // pred_region
          %s431 = sand.u32 %s114, 1
          %s432 = scalar_lea.sflag [#allocation4], %s431
          %s433 = sand.u32 %s114, 1
          %s434 = smul.addr %s433, 64
          %s435 = scalar_lea.vmem [#allocation7], %s434
          %436 = dma.done %s432, 1024
        $region52: #{tpu_custom_call.1} parent=47 // pred_fallthru
          _
      $region48: #{tpu_custom_call.1} parent=5 // pred_fallthru
        _
    $region6: #{tpu_custom_call.1} parent=1 // loop_footer
      %s20 = sadd.s32 1, %s16
    $region7: #{tpu_custom_call.1} parent=1 // loop_footer_branch
      %15 = sbr.rel target = $region3
    $region8: #{tpu_custom_call.1} parent=1 // loop_exit
      _
    %437 = vsyncpa [#allocation3], 1
    %s438 = scalar_lea.sflag [#allocation3], 1
    %439 = vsyncpa %s438, 1
    %440 = vsyncpa [#allocation6], 1
    %441 = vsyncpa [#allocation4], 1
    %s442 = scalar_lea.sflag [#allocation4], 1
    %443 = vsyncpa %s442, 1

</llo_original>
